<compile_context>
chip_gen: v6e
topology: v6e:2x2x1
jax: 0.10.0
libtpu: 0.0.40
codegen_flags: <defaults>
</compile_context>

<pallas_src>
import jax
import jax.numpy as jnp
from jax.experimental import pallas as pl


# ----------------------------------------------------------------------------
# Kernel: all heads fused, whole problem resident in VMEM (no grid).
# ----------------------------------------------------------------------------
def _fused_attn_kernel(x_ref, y_ref,
                       w1m_ref, b1m_ref, w2m_ref, b2m_ref,
                       w1p_ref, b1p_ref, w2p_ref, b2p_ref,
                       wl_ref, bl_ref,
                       out_ref):
    x = x_ref[...]                          # (B, D)  float32
    y = y_ref[...]                          # (B, S, D) float32
    B, S, D = y.shape
    ND = w2m_ref.shape[1]                   # n_blocks * D
    N = ND // D                             # number of heads
    inv_sqrt_d = jnp.float32(1.0 / (D ** 0.5))
    cdt = w1m_ref.dtype                     # bf16 compute dtype for MXU operands

    # ---- fc_met for all heads at once: (B, D) -> (B, N*H) -> (B, N*D) ------
    xh = jnp.dot(x.astype(cdt), w1m_ref[...],
                 preferred_element_type=jnp.float32) + b1m_ref[...]
    xh = jnp.maximum(xh, 0.0)               # ReLU (Dropout = identity in eval)
    xh = jnp.dot(xh.astype(cdt), w2m_ref[...],
                 preferred_element_type=jnp.float32) + b2m_ref[...]   # (B, N*D)

    # ---- fc_prot for all heads / all sequence positions at once ------------
    y2 = y.reshape(B * S, D)
    yh = jnp.dot(y2.astype(cdt), w1p_ref[...],
                 preferred_element_type=jnp.float32) + b1p_ref[...]
    yh = jnp.maximum(yh, 0.0)
    yh = jnp.dot(yh.astype(cdt), w2p_ref[...],
                 preferred_element_type=jnp.float32) + b2p_ref[...]   # (B*S, N*D)
    yh = yh.reshape(B, S, ND)

    # ---- per-head cross-attention (static unroll, N is small) --------------
    ctx_parts = []
    for n in range(N):
        lo = n * D
        xh_n = xh[:, lo:lo + D]             # (B, D)
        yh_n = yh[:, :, lo:lo + D]          # (B, S, D)

        # scores = <yh_n, xh_n> / sqrt(D)   -> (B, S)
        scores = jnp.sum(yh_n * xh_n[:, None, :], axis=-1) * inv_sqrt_d
        m = jnp.max(scores, axis=1, keepdims=True)
        e = jnp.exp(scores - m)
        z = e * pl.reciprocal(jnp.sum(e, axis=1, keepdims=True), approx=True)

        # ctx = z^T @ yh_n  -> (B, D)
        ctx_parts.append(jnp.sum(z[:, :, None] * yh_n, axis=1))

    ctx = jnp.concatenate(ctx_parts, axis=-1)                         # (B, N*D)

    # ---- final per-head linear fused as one block-diagonal matmul ----------
    out = jnp.dot(ctx.astype(cdt), wl_ref[...],
                  preferred_element_type=jnp.float32) + bl_ref[...]   # (B, N*O)
    out_ref[...] = out.astype(out_ref.dtype)


# ----------------------------------------------------------------------------
# Wrapper: fuse per-head parameters into lane-packed layouts, then one
# pallas_call with no grid (everything is a single VMEM block).
# ----------------------------------------------------------------------------
def _fuse_params(params, compute_dtype=jnp.bfloat16):
    """(n_blocks, ...) stacked params -> head-fused, lane-packed layouts."""
    w1m, b1m, w2m, b2m, w1p, b1p, w2p, b2p, wl, bl = params

    def cat_hidden(w):        # (N, D, H) -> (D, N*H)
        n, d, h = w.shape
        return jnp.transpose(w, (1, 0, 2)).reshape(d, n * h).astype(compute_dtype)

    def block_diag(w):        # (N, A, C) -> (N*A, N*C) block-diagonal
        n, a, c = w.shape
        eye = jnp.eye(n, dtype=w.dtype)
        return (w[:, :, None, :] * eye[:, None, :, None]
                ).reshape(n * a, n * c).astype(compute_dtype)

    def cat_bias(b):          # (N, 1, F) -> (1, N*F), kept f32 (post-acc add)
        return b.reshape(1, -1).astype(jnp.float32)

    return (cat_hidden(w1m), cat_bias(b1m), block_diag(w2m), cat_bias(b2m),
            cat_hidden(w1p), cat_bias(b1p), block_diag(w2p), cat_bias(b2p),
            block_diag(wl), cat_bias(bl))


def n_attn_block(x, y, params, *, compute_dtype=jnp.bfloat16):
    """All n_blocks heads in a single fused Pallas kernel invocation."""
    n_blocks = params[0].shape[0]
    output_dim = params[8].shape[-1]
    B = x.shape[0]

    fused = _fuse_params(params, compute_dtype)

    return pl.pallas_call(
        _fused_attn_kernel,
        out_shape=jax.ShapeDtypeStruct((B, n_blocks * output_dim), jnp.float32),
    )(x, y, *fused)


# ----------------------------------------------------------------------------
# Pure-JAX reference (eval-mode PyTorch semantics) + param construction.
# ----------------------------------------------------------------------------
def n_attn_block_ref(x, y, params):
    (w1m, b1m, w2m, b2m, w1p, b1p, w2p, b2p, wl, bl) = params
    n_blocks = w1m.shape[0]
    D = x.shape[1]
    outs = []
    for n in range(n_blocks):
        xh = jnp.maximum(x @ w1m[n] + b1m[n, 0], 0.0) @ w2m[n] + b2m[n, 0]
        yh = jnp.maximum(y @ w1p[n] + b1p[n, 0], 0.0) @ w2p[n] + b2p[n, 0]
        scores = jnp.einsum('bsd,bd->bs', yh, xh) / jnp.sqrt(jnp.float32(D))
        z = jax.nn.softmax(scores, axis=1)
        ctx = jnp.einsum('bs,bsd->bd', z, yh)
        outs.append(ctx @ wl[n] + bl[n, 0])
    return jnp.concatenate(outs, axis=1)


def make_params(key, input_dim, hidden_dim, output_dim, n_blocks):
    ks = jax.random.split(key, 10)
    s = 0.1
    w1m = jax.random.normal(ks[0], (n_blocks, input_dim, hidden_dim), jnp.float32) * s
    b1m = jax.random.normal(ks[1], (n_blocks, 1, hidden_dim), jnp.float32) * s
    w2m = jax.random.normal(ks[2], (n_blocks, hidden_dim, input_dim), jnp.float32) * s
    b2m = jax.random.normal(ks[3], (n_blocks, 1, input_dim), jnp.float32) * s
    w1p = jax.random.normal(ks[4], (n_blocks, input_dim, hidden_dim), jnp.float32) * s
    b1p = jax.random.normal(ks[5], (n_blocks, 1, hidden_dim), jnp.float32) * s
    w2p = jax.random.normal(ks[6], (n_blocks, hidden_dim, input_dim), jnp.float32) * s
    b2p = jax.random.normal(ks[7], (n_blocks, 1, input_dim), jnp.float32) * s
    wl  = jax.random.normal(ks[8], (n_blocks, input_dim, output_dim), jnp.float32) * s
    bl  = jax.random.normal(ks[9], (n_blocks, 1, output_dim), jnp.float32) * s
    return (w1m, b1m, w2m, b2m, w1p, b1p, w2p, b2p, wl, bl)


if __name__ == "__main__":
    B, S = 2, 8              # batch, protein sequence length
    input_dim = 16           # D
    hidden_dim = 32          # H
    output_dim = 4           # O (per head)
    n_blocks = 3             # parallel attention heads

    key = jax.random.PRNGKey(0)
    kx, ky, kp = jax.random.split(key, 3)
    x = jax.random.normal(kx, (B, input_dim), jnp.float32)       # metabolite features
    y = jax.random.normal(ky, (B, S, input_dim), jnp.float32)    # protein sequence
    params = make_params(kp, input_dim, hidden_dim, output_dim, n_blocks)

    out = jax.jit(n_attn_block)(x, y, params)
    jax.block_until_ready(out)

    ref = n_attn_block_ref(x, y, params)
    assert out.shape == (B, n_blocks * output_dim), out.shape
    # bf16 matmul operands + approx reciprocal -> slightly looser tolerance.
    assert jnp.allclose(out, ref, atol=2e-2, rtol=2e-2), float(jnp.max(jnp.abs(out - ref)))

    print("KERNEL_OK")
</pallas_src>

<mosaic_0001>
module attributes {stable_mosaic.version = 11 : i64} {
  func.func @_fused_attn_kernel(%arg0: memref<2x16xf32, #tpu.memory_space<vmem>>, %arg1: memref<2x8x16xf32, #tpu.memory_space<vmem>>, %arg2: memref<16x96xbf16, #tpu.memory_space<vmem>>, %arg3: memref<1x96xf32, #tpu.memory_space<vmem>>, %arg4: memref<96x48xbf16, #tpu.memory_space<vmem>>, %arg5: memref<1x48xf32, #tpu.memory_space<vmem>>, %arg6: memref<16x96xbf16, #tpu.memory_space<vmem>>, %arg7: memref<1x96xf32, #tpu.memory_space<vmem>>, %arg8: memref<96x48xbf16, #tpu.memory_space<vmem>>, %arg9: memref<1x48xf32, #tpu.memory_space<vmem>>, %arg10: memref<48x12xbf16, #tpu.memory_space<vmem>>, %arg11: memref<1x12xf32, #tpu.memory_space<vmem>>, %arg12: memref<2x12xf32, #tpu.memory_space<vmem>>) attributes {dimension_semantics = [], scalar_prefetch = 0 : i64, scratch_operands = 0 : i64, tpu.core_type = #tpu.core_type<tc>} {
    %c0 = arith.constant 0 : index
    %c0_0 = arith.constant 0 : index
    %0 = vector.load %arg0[%c0, %c0_0] : memref<2x16xf32, #tpu.memory_space<vmem>>, vector<2x16xf32>
    %c0_1 = arith.constant 0 : index
    %c0_2 = arith.constant 0 : index
    %c0_3 = arith.constant 0 : index
    %1 = vector.load %arg1[%c0_1, %c0_2, %c0_3] : memref<2x8x16xf32, #tpu.memory_space<vmem>>, vector<2x8x16xf32>
    %2 = arith.truncf %0 : vector<2x16xf32> to vector<2x16xbf16>
    %c0_4 = arith.constant 0 : index
    %c0_5 = arith.constant 0 : index
    %3 = vector.load %arg2[%c0_4, %c0_5] : memref<16x96xbf16, #tpu.memory_space<vmem>>, vector<16x96xbf16>
    %cst = arith.constant dense<0.000000e+00> : vector<2x96xf32>
    %4 = tpu.matmul %2, %3, %cst {dimension_numbers = #tpu.dot_dimension_numbers<[1], [0], [0], [1], [0, 0, 1, 1], [], []>} : vector<2x16xbf16>, vector<16x96xbf16>, vector<2x96xf32> -> vector<2x96xf32>
    %c0_6 = arith.constant 0 : index
    %c0_7 = arith.constant 0 : index
    %5 = vector.load %arg3[%c0_6, %c0_7] : memref<1x96xf32, #tpu.memory_space<vmem>>, vector<1x96xf32>
    %6 = vector.broadcast %5 : vector<1x96xf32> to vector<2x96xf32>
    %7 = arith.addf %4, %6 : vector<2x96xf32>
    %cst_8 = arith.constant 0.000000e+00 : f32
    %8 = vector.broadcast %cst_8 : f32 to vector<2x96xf32>
    %9 = arith.maximumf %7, %8 : vector<2x96xf32>
    %10 = arith.truncf %9 : vector<2x96xf32> to vector<2x96xbf16>
    %c0_9 = arith.constant 0 : index
    %c0_10 = arith.constant 0 : index
    %11 = vector.load %arg4[%c0_9, %c0_10] : memref<96x48xbf16, #tpu.memory_space<vmem>>, vector<96x48xbf16>
    %cst_11 = arith.constant dense<0.000000e+00> : vector<2x48xf32>
    %12 = tpu.matmul %10, %11, %cst_11 {dimension_numbers = #tpu.dot_dimension_numbers<[1], [0], [0], [1], [0, 0, 1, 1], [], []>} : vector<2x96xbf16>, vector<96x48xbf16>, vector<2x48xf32> -> vector<2x48xf32>
    %c0_12 = arith.constant 0 : index
    %c0_13 = arith.constant 0 : index
    %13 = vector.load %arg5[%c0_12, %c0_13] : memref<1x48xf32, #tpu.memory_space<vmem>>, vector<1x48xf32>
    %14 = vector.broadcast %13 : vector<1x48xf32> to vector<2x48xf32>
    %15 = arith.addf %12, %14 : vector<2x48xf32>
    %16 = vector.shape_cast %1 : vector<2x8x16xf32> to vector<16x16xf32>
    %17 = arith.truncf %16 : vector<16x16xf32> to vector<16x16xbf16>
    %c0_14 = arith.constant 0 : index
    %c0_15 = arith.constant 0 : index
    %18 = vector.load %arg6[%c0_14, %c0_15] : memref<16x96xbf16, #tpu.memory_space<vmem>>, vector<16x96xbf16>
    %cst_16 = arith.constant dense<0.000000e+00> : vector<16x96xf32>
    %19 = tpu.matmul %17, %18, %cst_16 {dimension_numbers = #tpu.dot_dimension_numbers<[1], [0], [0], [1], [0, 0, 1, 1], [], []>} : vector<16x16xbf16>, vector<16x96xbf16>, vector<16x96xf32> -> vector<16x96xf32>
    %c0_17 = arith.constant 0 : index
    %c0_18 = arith.constant 0 : index
    %20 = vector.load %arg7[%c0_17, %c0_18] : memref<1x96xf32, #tpu.memory_space<vmem>>, vector<1x96xf32>
    %21 = vector.broadcast %20 : vector<1x96xf32> to vector<16x96xf32>
    %22 = arith.addf %19, %21 : vector<16x96xf32>
    %cst_19 = arith.constant 0.000000e+00 : f32
    %23 = vector.broadcast %cst_19 : f32 to vector<16x96xf32>
    %24 = arith.maximumf %22, %23 : vector<16x96xf32>
    %25 = arith.truncf %24 : vector<16x96xf32> to vector<16x96xbf16>
    %c0_20 = arith.constant 0 : index
    %c0_21 = arith.constant 0 : index
    %26 = vector.load %arg8[%c0_20, %c0_21] : memref<96x48xbf16, #tpu.memory_space<vmem>>, vector<96x48xbf16>
    %cst_22 = arith.constant dense<0.000000e+00> : vector<16x48xf32>
    %27 = tpu.matmul %25, %26, %cst_22 {dimension_numbers = #tpu.dot_dimension_numbers<[1], [0], [0], [1], [0, 0, 1, 1], [], []>} : vector<16x96xbf16>, vector<96x48xbf16>, vector<16x48xf32> -> vector<16x48xf32>
    %c0_23 = arith.constant 0 : index
    %c0_24 = arith.constant 0 : index
    %28 = vector.load %arg9[%c0_23, %c0_24] : memref<1x48xf32, #tpu.memory_space<vmem>>, vector<1x48xf32>
    %29 = vector.broadcast %28 : vector<1x48xf32> to vector<16x48xf32>
    %30 = arith.addf %27, %29 : vector<16x48xf32>
    %31 = vector.shape_cast %30 : vector<16x48xf32> to vector<2x8x48xf32>
    %32 = vector.extract_strided_slice %15 {offsets = [0, 0], sizes = [2, 16], strides = [1, 1]} : vector<2x48xf32> to vector<2x16xf32>
    %33 = vector.extract_strided_slice %31 {offsets = [0, 0, 0], sizes = [2, 8, 16], strides = [1, 1, 1]} : vector<2x8x48xf32> to vector<2x8x16xf32>
    %34 = vector.shape_cast %32 : vector<2x16xf32> to vector<2x1x16xf32>
    %35 = vector.broadcast %34 : vector<2x1x16xf32> to vector<2x8x16xf32>
    %36 = arith.mulf %33, %35 : vector<2x8x16xf32>
    %cst_25 = arith.constant dense<0.000000e+00> : vector<2x8xf32>
    %37 = vector.multi_reduction <add>, %36, %cst_25 [2] : vector<2x8x16xf32> to vector<2x8xf32>
    %cst_26 = arith.constant 2.500000e-01 : f32
    %38 = vector.broadcast %cst_26 : f32 to vector<2x8xf32>
    %39 = arith.mulf %37, %38 : vector<2x8xf32>
    %cst_27 = arith.constant dense<0xFF800000> : vector<2xf32>
    %40 = vector.multi_reduction <maximumf>, %39, %cst_27 [1] : vector<2x8xf32> to vector<2xf32>
    %41 = vector.shape_cast %40 : vector<2xf32> to vector<2x1xf32>
    %42 = vector.broadcast %41 : vector<2x1xf32> to vector<2x8xf32>
    %43 = arith.subf %39, %42 : vector<2x8xf32>
    %44 = math.exp %43 : vector<2x8xf32>
    %cst_28 = arith.constant dense<0.000000e+00> : vector<2xf32>
    %45 = vector.multi_reduction <add>, %44, %cst_28 [1] : vector<2x8xf32> to vector<2xf32>
    %46 = vector.shape_cast %45 : vector<2xf32> to vector<2x1xf32>
    %47 = tpu.reciprocal %46 {approx = true} : vector<2x1xf32> -> vector<2x1xf32>
    %48 = vector.broadcast %47 : vector<2x1xf32> to vector<2x8xf32>
    %49 = arith.mulf %44, %48 : vector<2x8xf32>
    %50 = vector.shape_cast %49 : vector<2x8xf32> to vector<2x8x1xf32>
    %51 = vector.broadcast %50 : vector<2x8x1xf32> to vector<2x8x16xf32>
    %52 = arith.mulf %51, %33 : vector<2x8x16xf32>
    %cst_29 = arith.constant dense<0.000000e+00> : vector<2x16xf32>
    %53 = vector.multi_reduction <add>, %52, %cst_29 [1] : vector<2x8x16xf32> to vector<2x16xf32>
    %54 = vector.extract_strided_slice %15 {offsets = [0, 16], sizes = [2, 16], strides = [1, 1]} : vector<2x48xf32> to vector<2x16xf32>
    %55 = vector.extract_strided_slice %31 {offsets = [0, 0, 16], sizes = [2, 8, 16], strides = [1, 1, 1]} : vector<2x8x48xf32> to vector<2x8x16xf32>
    %56 = vector.shape_cast %54 : vector<2x16xf32> to vector<2x1x16xf32>
    %57 = vector.broadcast %56 : vector<2x1x16xf32> to vector<2x8x16xf32>
    %58 = arith.mulf %55, %57 : vector<2x8x16xf32>
    %cst_30 = arith.constant dense<0.000000e+00> : vector<2x8xf32>
    %59 = vector.multi_reduction <add>, %58, %cst_30 [2] : vector<2x8x16xf32> to vector<2x8xf32>
    %cst_31 = arith.constant 2.500000e-01 : f32
    %60 = vector.broadcast %cst_31 : f32 to vector<2x8xf32>
    %61 = arith.mulf %59, %60 : vector<2x8xf32>
    %cst_32 = arith.constant dense<0xFF800000> : vector<2xf32>
    %62 = vector.multi_reduction <maximumf>, %61, %cst_32 [1] : vector<2x8xf32> to vector<2xf32>
    %63 = vector.shape_cast %62 : vector<2xf32> to vector<2x1xf32>
    %64 = vector.broadcast %63 : vector<2x1xf32> to vector<2x8xf32>
    %65 = arith.subf %61, %64 : vector<2x8xf32>
    %66 = math.exp %65 : vector<2x8xf32>
    %cst_33 = arith.constant dense<0.000000e+00> : vector<2xf32>
    %67 = vector.multi_reduction <add>, %66, %cst_33 [1] : vector<2x8xf32> to vector<2xf32>
    %68 = vector.shape_cast %67 : vector<2xf32> to vector<2x1xf32>
    %69 = tpu.reciprocal %68 {approx = true} : vector<2x1xf32> -> vector<2x1xf32>
    %70 = vector.broadcast %69 : vector<2x1xf32> to vector<2x8xf32>
    %71 = arith.mulf %66, %70 : vector<2x8xf32>
    %72 = vector.shape_cast %71 : vector<2x8xf32> to vector<2x8x1xf32>
    %73 = vector.broadcast %72 : vector<2x8x1xf32> to vector<2x8x16xf32>
    %74 = arith.mulf %73, %55 : vector<2x8x16xf32>
    %cst_34 = arith.constant dense<0.000000e+00> : vector<2x16xf32>
    %75 = vector.multi_reduction <add>, %74, %cst_34 [1] : vector<2x8x16xf32> to vector<2x16xf32>
    %76 = vector.extract_strided_slice %15 {offsets = [0, 32], sizes = [2, 16], strides = [1, 1]} : vector<2x48xf32> to vector<2x16xf32>
    %77 = vector.extract_strided_slice %31 {offsets = [0, 0, 32], sizes = [2, 8, 16], strides = [1, 1, 1]} : vector<2x8x48xf32> to vector<2x8x16xf32>
    %78 = vector.shape_cast %76 : vector<2x16xf32> to vector<2x1x16xf32>
    %79 = vector.broadcast %78 : vector<2x1x16xf32> to vector<2x8x16xf32>
    %80 = arith.mulf %77, %79 : vector<2x8x16xf32>
    %cst_35 = arith.constant dense<0.000000e+00> : vector<2x8xf32>
    %81 = vector.multi_reduction <add>, %80, %cst_35 [2] : vector<2x8x16xf32> to vector<2x8xf32>
    %cst_36 = arith.constant 2.500000e-01 : f32
    %82 = vector.broadcast %cst_36 : f32 to vector<2x8xf32>
    %83 = arith.mulf %81, %82 : vector<2x8xf32>
    %cst_37 = arith.constant dense<0xFF800000> : vector<2xf32>
    %84 = vector.multi_reduction <maximumf>, %83, %cst_37 [1] : vector<2x8xf32> to vector<2xf32>
    %85 = vector.shape_cast %84 : vector<2xf32> to vector<2x1xf32>
    %86 = vector.broadcast %85 : vector<2x1xf32> to vector<2x8xf32>
    %87 = arith.subf %83, %86 : vector<2x8xf32>
    %88 = math.exp %87 : vector<2x8xf32>
    %cst_38 = arith.constant dense<0.000000e+00> : vector<2xf32>
    %89 = vector.multi_reduction <add>, %88, %cst_38 [1] : vector<2x8xf32> to vector<2xf32>
    %90 = vector.shape_cast %89 : vector<2xf32> to vector<2x1xf32>
    %91 = tpu.reciprocal %90 {approx = true} : vector<2x1xf32> -> vector<2x1xf32>
    %92 = vector.broadcast %91 : vector<2x1xf32> to vector<2x8xf32>
    %93 = arith.mulf %88, %92 : vector<2x8xf32>
    %94 = vector.shape_cast %93 : vector<2x8xf32> to vector<2x8x1xf32>
    %95 = vector.broadcast %94 : vector<2x8x1xf32> to vector<2x8x16xf32>
    %96 = arith.mulf %95, %77 : vector<2x8x16xf32>
    %cst_39 = arith.constant dense<0.000000e+00> : vector<2x16xf32>
    %97 = vector.multi_reduction <add>, %96, %cst_39 [1] : vector<2x8x16xf32> to vector<2x16xf32>
    %98 = tpu.concatenate %53, %75, %97 in 1 : vector<2x16xf32>, vector<2x16xf32>, vector<2x16xf32> -> vector<2x48xf32>
    %99 = arith.truncf %98 : vector<2x48xf32> to vector<2x48xbf16>
    %c0_40 = arith.constant 0 : index
    %c0_41 = arith.constant 0 : index
    %100 = vector.load %arg10[%c0_40, %c0_41] : memref<48x12xbf16, #tpu.memory_space<vmem>>, vector<48x12xbf16>
    %cst_42 = arith.constant dense<0.000000e+00> : vector<2x12xf32>
    %101 = tpu.matmul %99, %100, %cst_42 {dimension_numbers = #tpu.dot_dimension_numbers<[1], [0], [0], [1], [0, 0, 1, 1], [], []>} : vector<2x48xbf16>, vector<48x12xbf16>, vector<2x12xf32> -> vector<2x12xf32>
    %c0_43 = arith.constant 0 : index
    %c0_44 = arith.constant 0 : index
    %102 = vector.load %arg11[%c0_43, %c0_44] : memref<1x12xf32, #tpu.memory_space<vmem>>, vector<1x12xf32>
    %103 = vector.broadcast %102 : vector<1x12xf32> to vector<2x12xf32>
    %104 = arith.addf %101, %103 : vector<2x12xf32>
    %c0_45 = arith.constant 0 : index
    %c0_46 = arith.constant 0 : index
    %105 = vector.load %arg12[%c0_45, %c0_46] : memref<2x12xf32, #tpu.memory_space<vmem>>, vector<2x12xf32>
    tpu.vector_store %arg12[%c0_45, %c0_46], %104 {strides = array<i32>} : memref<2x12xf32, #tpu.memory_space<vmem>>, vector<2x12xf32>,
    return
  }
}

</mosaic_0001>

<llo_original>
// kernel: n_attn_block.1
$region0: #{n_attn_block.1}
  #allocation0 [shape = 'u32[]', space=smem, size = 0x4, offset = 0x4, fixed_abs, tag = 'smem constant byte address 0x4 - core index']
  #allocation1 [shape = 'u32[144,128]{1,0:T(1,128)}', space=vmem, size = 0x12000, scoped, tag = 'internal scratch']
  %s0 = inlined_call_operand.vmem [shape: f32[2,16], index: 0, kind: input, shape index: {}]
  %s1 = inlined_call_operand.vmem [shape: f32[2,8,16], index: 1, kind: input, shape index: {}]
  %s2 = inlined_call_operand.vmem [shape: bf16[16,96], index: 2, kind: input, shape index: {}]
  %s3 = inlined_call_operand.vmem [shape: f32[1,96], index: 3, kind: input, shape index: {}]
  %s4 = inlined_call_operand.vmem [shape: bf16[96,48], index: 4, kind: input, shape index: {}]
  %s5 = inlined_call_operand.vmem [shape: f32[1,48], index: 5, kind: input, shape index: {}]
  %s6 = inlined_call_operand.vmem [shape: bf16[16,96], index: 6, kind: input, shape index: {}]
  %s7 = inlined_call_operand.vmem [shape: f32[1,96], index: 7, kind: input, shape index: {}]
  %s8 = inlined_call_operand.vmem [shape: bf16[96,48], index: 8, kind: input, shape index: {}]
  %s9 = inlined_call_operand.vmem [shape: f32[1,48], index: 9, kind: input, shape index: {}]
  %s10 = inlined_call_operand.vmem [shape: bf16[48,12], index: 10, kind: input, shape index: {}]
  %s11 = inlined_call_operand.vmem [shape: f32[1,12], index: 11, kind: input, shape index: {}]
  %s12 = inlined_call_operand.hbm [shape: f32[2,12], index: 12, kind: output, shape index: {}]
  %s13 = sld [smem:[#allocation0]]
  $region58: #{n_attn_block.1} parent=0
    _
  %s15 = ssub.s32 1, %s13
  %s16 = scalar_select 0, %s15, %s13
  $region1: #{n_attn_block.1} parent=0
    #allocation2 [shape = 'u8[1024]{0}', space=vmem, size = 0x400, scoped, tag = 'output window, operand 0, single buffered']
    #allocation3 [shape = 's32[1]{0}', space=sflag, size = 0x4, scoped, tag = 'scoped memory for n_attn_block.1']
    %17 = vsyncpa [#allocation3], 0
    // Predicated region
    $region2: #{n_attn_block.1} parent=1 // pred_check
      _
    $region3: #{n_attn_block.1} parent=1 // pred_check_branch
      %19 = sbr.rel (0) target = $region5
    $region4: #{n_attn_block.1} parent=1 // pred_region
      _
    $region5: #{n_attn_block.1} parent=1 // pred_fallthru
      _
    // Predicated region
    $region6: #{n_attn_block.1} parent=1 // pred_check
      _
    $region7: #{n_attn_block.1} parent=1 // pred_check_branch
      %21 = sbr.rel (0) target = $region9
    $region8: #{n_attn_block.1} parent=1 // pred_region
      _
    $region9: #{n_attn_block.1} parent=1 // pred_fallthru
      _
    // Predicated region
    $region10: #{n_attn_block.1} parent=1 // pred_check
      _
    $region11: #{n_attn_block.1} parent=1 // pred_check_branch
      %23 = sbr.rel (0) target = $region13
    $region12: #{n_attn_block.1} parent=1 // pred_region
      _
    $region13: #{n_attn_block.1} parent=1 // pred_fallthru
      _
    // Predicated region
    $region14: #{n_attn_block.1} parent=1 // pred_check
      _
    $region15: #{n_attn_block.1} parent=1 // pred_check_branch
      %25 = sbr.rel (0) target = $region17
    $region16: #{n_attn_block.1} parent=1 // pred_region
      _
    $region17: #{n_attn_block.1} parent=1 // pred_fallthru
      _
    // Predicated region
    $region18: #{n_attn_block.1} parent=1 // pred_check
      _
    $region19: #{n_attn_block.1} parent=1 // pred_check_branch
      %27 = sbr.rel (0) target = $region21
    $region20: #{n_attn_block.1} parent=1 // pred_region
      _
    $region21: #{n_attn_block.1} parent=1 // pred_fallthru
      _
    // Predicated region
    $region22: #{n_attn_block.1} parent=1 // pred_check
      _
    $region23: #{n_attn_block.1} parent=1 // pred_check_branch
      %29 = sbr.rel (0) target = $region25
    $region24: #{n_attn_block.1} parent=1 // pred_region
      _
    $region25: #{n_attn_block.1} parent=1 // pred_fallthru
      _
    // Predicated region
    $region26: #{n_attn_block.1} parent=1 // pred_check
      _
    $region27: #{n_attn_block.1} parent=1 // pred_check_branch
      %31 = sbr.rel (0) target = $region29
    $region28: #{n_attn_block.1} parent=1 // pred_region
      _
    $region29: #{n_attn_block.1} parent=1 // pred_fallthru
      _
    // Predicated region
    $region30: #{n_attn_block.1} parent=1 // pred_check
      _
    $region31: #{n_attn_block.1} parent=1 // pred_check_branch
      %33 = sbr.rel (0) target = $region33
    $region32: #{n_attn_block.1} parent=1 // pred_region
      _
    $region33: #{n_attn_block.1} parent=1 // pred_fallthru
      _
    // Predicated region
    $region34: #{n_attn_block.1} parent=1 // pred_check
      _
    $region35: #{n_attn_block.1} parent=1 // pred_check_branch
      %35 = sbr.rel (0) target = $region37
    $region36: #{n_attn_block.1} parent=1 // pred_region
      _
    $region37: #{n_attn_block.1} parent=1 // pred_fallthru
      _
    // Predicated region
    $region38: #{n_attn_block.1} parent=1 // pred_check
      _
    $region39: #{n_attn_block.1} parent=1 // pred_check_branch
      %37 = sbr.rel (0) target = $region41
    $region40: #{n_attn_block.1} parent=1 // pred_region
      _
    $region41: #{n_attn_block.1} parent=1 // pred_fallthru
      _
    // Predicated region
    $region42: #{n_attn_block.1} parent=1 // pred_check
      _
    $region43: #{n_attn_block.1} parent=1 // pred_check_branch
      %39 = sbr.rel (0) target = $region45
    $region44: #{n_attn_block.1} parent=1 // pred_region
      _
    $region45: #{n_attn_block.1} parent=1 // pred_fallthru
      _
    // Predicated region
    $region46: #{n_attn_block.1} parent=1 // pred_check
      _
    $region47: #{n_attn_block.1} parent=1 // pred_check_branch
      %41 = sbr.rel (0) target = $region49
    $region48: #{n_attn_block.1} parent=1 // pred_region
      _
    $region49: #{n_attn_block.1} parent=1 // pred_fallthru
      _
    %v43 = vld [vmem:[%s0] sm:$0x3]
    %v44 = vld [vmem:[%s1] sm:$0xff]
    %v45 = vld [vmem:[%s1 + $0x8] sm:$0xff]
    %v46 = vpack.c.bf16 %v43, %v43
    %v47 = vld [vmem:[%s2] sm:$0xf]
    %v48 = vld [vmem:[%s2 + $0x4] sm:$0xf]
    %v49 = vld [vmem:[%s3] sm:$0x1]
    %v51 = vlaneseq
    %v52 = vshrl.u32 %v51, 7
    %v53 = vsub.s32 0, %v52
    %v54 = vrot.slane %v49, %v53
    %v58 = vunpack.c.l.b16 %v47
    %v59 = vunpack.c.l.b16 %v48
    %v60 = vpack.c.b16 %v59, %v58
    %vm62 = vcmask 130048
    %v64 = vsel %vm62, %v46, 0
    %66 = vmatprep.subr.bf16.mxu0 0
    %67 = vmatpush1.bf16.msra.mxu0 0
    %68 = vmatprep.subr.bf16.mxu0 0
    %69 = vmatpush1.bf16.msra.mxu0 0
    %70 = vmatprep.subr.bf16.mxu0 0
    %71 = vmatpush1.bf16.msra.mxu0 0
    %72 = vmatprep.subr.bf16.mxu0 0
    %73 = vmatpush1.bf16.msra.mxu0 0
    %74 = vmatprep.subr.bf16.mxu0 0
    %75 = vmatpush1.bf16.msra.mxu0 0
    %76 = vmatprep.subr.bf16.mxu0 0
    %77 = vmatpush1.bf16.msra.mxu0 0
    %78 = vmatprep.subr.bf16.mxu0 0
    %79 = vmatpush1.bf16.msra.mxu0 0
    %80 = vmatprep.subr.bf16.mxu0 0
    %81 = vmatpush1.bf16.msra.mxu0 %v60
    %82 = vmatprep.subr.bf16.mxu0 0
    %83 = vmatpush2.bf16.msra.mxu0 0
    %84 = vmatprep.subr.bf16.mxu0 0
    %85 = vmatpush2.bf16.msra.mxu0 0
    %86 = vmatprep.subr.bf16.mxu0 0
    %87 = vmatpush2.bf16.msra.mxu0 0
    %88 = vmatprep.subr.bf16.mxu0 0
    %89 = vmatpush2.bf16.msra.mxu0 0
    %90 = vmatprep.subr.bf16.mxu0 0
    %91 = vmatpush2.bf16.msra.mxu0 0
    %92 = vmatprep.subr.bf16.mxu0 0
    %93 = vmatpush2.bf16.msra.mxu0 0
    %94 = vmatprep.subr.bf16.mxu0 0
    %95 = vmatpush2.bf16.msra.mxu0 0
    %96 = vmatprep.subr.bf16.mxu0 0
    %97 = vmatpush2.bf16.msra.mxu0 0
    %98 = vmatprep.mubr.bf16.mxu0 0
    %99 = vmatmul.mubr.bf16.gmra.mxu0 %v64
    %v100 = vpop.f32.mrf.mxu0
    %v101 = vadd.f32 %v54, %v100
    %v102 = vpop.f32.mrf.mxu0
    %v103 = vpop.f32.mrf.mxu0
    %v104 = vpop.f32.mrf.mxu0
    %105 = vdwg.mxu0
    %v106 = vmax.f32 %v101, 0.0
    %v107 = vpack.c.bf16 %v106, %v106
    %v108 = vld [vmem:[%s4] sm:$0xf]
    %v109 = vld [vmem:[%s4 + $0x4] sm:$0xf]
    %v110 = vld [vmem:[%s4 + $0x8] sm:$0xf]
    %v111 = vld [vmem:[%s4 + $0xc] sm:$0xf]
    %v112 = vld [vmem:[%s4 + $0x10] sm:$0xf]
    %v113 = vld [vmem:[%s4 + $0x14] sm:$0xf]
    %v114 = vld [vmem:[%s4 + $0x18] sm:$0xf]
    %v115 = vld [vmem:[%s4 + $0x1c] sm:$0xf]
    %v116 = vld [vmem:[%s4 + $0x20] sm:$0xf]
    %v117 = vld [vmem:[%s4 + $0x24] sm:$0xf]
    %v118 = vld [vmem:[%s4 + $0x28] sm:$0xf]
    %v119 = vld [vmem:[%s4 + $0x2c] sm:$0xf]
    %v120 = vld [vmem:[%s5] sm:$0x1]
    %v122 = vlaneseq
    %v123 = vshrl.u32 %v122, 7
    %v124 = vsub.s32 0, %v123
    %v125 = vrot.slane %v120, %v124
    %v139 = vunpack.c.l.b16 %v108
    %v140 = vunpack.c.l.b16 %v109
    %v141 = vunpack.c.l.b16 %v110
    %v142 = vunpack.c.l.b16 %v111
    %v143 = vunpack.c.l.b16 %v112
    %v144 = vunpack.c.l.b16 %v113
    %v145 = vunpack.c.l.b16 %v114
    %v146 = vunpack.c.l.b16 %v115
    %v147 = vunpack.c.l.b16 %v116
    %v148 = vunpack.c.l.b16 %v117
    %v149 = vunpack.c.l.b16 %v118
    %v150 = vunpack.c.l.b16 %v119
    %v151 = vpack.c.b16 %v140, %v139
    %v152 = vpack.c.b16 %v142, %v141
    %v153 = vpack.c.b16 %v144, %v143
    %v154 = vpack.c.b16 %v146, %v145
    %v155 = vpack.c.b16 %v148, %v147
    %v156 = vpack.c.b16 %v150, %v149
    %vm163 = vcmask 785408
    %v165 = vsel %vm163, %v107, 0
    %167 = vmatprep.subr.bf16.mxu0 0
    %168 = vmatpush1.bf16.msra.mxu0 0
    %169 = vmatprep.subr.bf16.mxu0 0
    %170 = vmatpush1.bf16.msra.mxu0 0
    %171 = vmatprep.subr.bf16.mxu0 0
    %172 = vmatpush1.bf16.msra.mxu0 %v156
    %173 = vmatprep.subr.bf16.mxu0 0
    %174 = vmatpush1.bf16.msra.mxu0 %v155
    %175 = vmatprep.subr.bf16.mxu0 0
    %176 = vmatpush1.bf16.msra.mxu0 %v154
    %177 = vmatprep.subr.bf16.mxu0 0
    %178 = vmatpush1.bf16.msra.mxu0 %v153
    %179 = vmatprep.subr.bf16.mxu0 0
    %180 = vmatpush1.bf16.msra.mxu0 %v152
    %181 = vmatprep.subr.bf16.mxu0 0
    %182 = vmatpush1.bf16.msra.mxu0 %v151
    %183 = vmatprep.subr.bf16.mxu0 0
    %184 = vmatpush2.bf16.msra.mxu0 0
    %185 = vmatprep.subr.bf16.mxu0 0
    %186 = vmatpush2.bf16.msra.mxu0 0
    %187 = vmatprep.subr.bf16.mxu0 0
    %188 = vmatpush2.bf16.msra.mxu0 0
    %189 = vmatprep.subr.bf16.mxu0 0
    %190 = vmatpush2.bf16.msra.mxu0 0
    %191 = vmatprep.subr.bf16.mxu0 0
    %192 = vmatpush2.bf16.msra.mxu0 0
    %193 = vmatprep.subr.bf16.mxu0 0
    %194 = vmatpush2.bf16.msra.mxu0 0
    %195 = vmatprep.subr.bf16.mxu0 0
    %196 = vmatpush2.bf16.msra.mxu0 0
    %197 = vmatprep.subr.bf16.mxu0 0
    %198 = vmatpush2.bf16.msra.mxu0 0
    %199 = vmatprep.mubr.bf16.mxu0 0
    %200 = vmatmul.mubr.bf16.gmra.mxu0 %v165
    %v201 = vpop.f32.mrf.mxu0
    %v202 = vadd.f32 %v125, %v201
    %v203 = vpop.f32.mrf.mxu0
    %v204 = vpop.f32.mrf.mxu0
    %v205 = vpop.f32.mrf.mxu0
    %206 = vdwg.mxu0
    %v207 = vpack.c.bf16 %v45, %v44
    %v208 = vld [vmem:[%s6] sm:$0xf]
    %v209 = vld [vmem:[%s6 + $0x4] sm:$0xf]
    %v210 = vld [vmem:[%s7] sm:$0x1]
    %v212 = vlaneseq
    %v213 = vshrl.u32 %v212, 7
    %v214 = vsub.s32 0, %v213
    %v215 = vrot.slane %v210, %v214
    %v219 = vunpack.c.l.b16 %v208
    %v220 = vunpack.c.l.b16 %v209
    %v221 = vpack.c.b16 %v220, %v219
    %v224 = vsel %vm62, %v207, 0
    %226 = vmatprep.subr.bf16.mxu0 0
    %227 = vmatpush1.bf16.msra.mxu0 0
    %228 = vmatprep.subr.bf16.mxu0 0
    %229 = vmatpush1.bf16.msra.mxu0 0
    %230 = vmatprep.subr.bf16.mxu0 0
    %231 = vmatpush1.bf16.msra.mxu0 0
    %232 = vmatprep.subr.bf16.mxu0 0
    %233 = vmatpush1.bf16.msra.mxu0 0
    %234 = vmatprep.subr.bf16.mxu0 0
    %235 = vmatpush1.bf16.msra.mxu0 0
    %236 = vmatprep.subr.bf16.mxu0 0
    %237 = vmatpush1.bf16.msra.mxu0 0
    %238 = vmatprep.subr.bf16.mxu0 0
    %239 = vmatpush1.bf16.msra.mxu0 0
    %240 = vmatprep.subr.bf16.mxu0 0
    %241 = vmatpush1.bf16.msra.mxu0 %v221
    %242 = vmatprep.subr.bf16.mxu0 0
    %243 = vmatpush2.bf16.msra.mxu0 0
    %244 = vmatprep.subr.bf16.mxu0 0
    %245 = vmatpush2.bf16.msra.mxu0 0
    %246 = vmatprep.subr.bf16.mxu0 0
    %247 = vmatpush2.bf16.msra.mxu0 0
    %248 = vmatprep.subr.bf16.mxu0 0
    %249 = vmatpush2.bf16.msra.mxu0 0
    %250 = vmatprep.subr.bf16.mxu0 0
    %251 = vmatpush2.bf16.msra.mxu0 0
    %252 = vmatprep.subr.bf16.mxu0 0
    %253 = vmatpush2.bf16.msra.mxu0 0
    %254 = vmatprep.subr.bf16.mxu0 0
    %255 = vmatpush2.bf16.msra.mxu0 0
    %256 = vmatprep.subr.bf16.mxu0 0
    %257 = vmatpush2.bf16.msra.mxu0 0
    %258 = vmatprep.mubr.bf16.mxu0 0
    %259 = vmatmul.mubr.bf16.gmra.mxu0 %v224
    %v260 = vpop.f32.mrf.mxu0
    %v261 = vadd.f32 %v215, %v260
    %v262 = vpop.f32.mrf.mxu0
    %v263 = vpop.f32.mrf.mxu0
    %v264 = vadd.f32 %v215, %v263
    %v265 = vpop.f32.mrf.mxu0
    %266 = vdwg.mxu0
    %v267 = vmax.f32 %v261, 0.0
    %v268 = vmax.f32 %v264, 0.0
    %v269 = vpack.c.bf16 %v268, %v267
    %v270 = vld [vmem:[%s8] sm:$0xf]
    %v271 = vld [vmem:[%s8 + $0x4] sm:$0xf]
    %v272 = vld [vmem:[%s8 + $0x8] sm:$0xf]
    %v273 = vld [vmem:[%s8 + $0xc] sm:$0xf]
    %v274 = vld [vmem:[%s8 + $0x10] sm:$0xf]
    %v275 = vld [vmem:[%s8 + $0x14] sm:$0xf]
    %v276 = vld [vmem:[%s8 + $0x18] sm:$0xf]
    %v277 = vld [vmem:[%s8 + $0x1c] sm:$0xf]
    %v278 = vld [vmem:[%s8 + $0x20] sm:$0xf]
    %v279 = vld [vmem:[%s8 + $0x24] sm:$0xf]
    %v280 = vld [vmem:[%s8 + $0x28] sm:$0xf]
    %v281 = vld [vmem:[%s8 + $0x2c] sm:$0xf]
    %v282 = vld [vmem:[%s9] sm:$0x1]
    %v284 = vlaneseq
    %v285 = vshrl.u32 %v284, 7
    %v286 = vsub.s32 0, %v285
    %v287 = vrot.slane %v282, %v286
    %v301 = vunpack.c.l.b16 %v270
    %v302 = vunpack.c.l.b16 %v271
    %v303 = vunpack.c.l.b16 %v272
    %v304 = vunpack.c.l.b16 %v273
    %v305 = vunpack.c.l.b16 %v274
    %v306 = vunpack.c.l.b16 %v275
    %v307 = vunpack.c.l.b16 %v276
    %v308 = vunpack.c.l.b16 %v277
    %v309 = vunpack.c.l.b16 %v278
    %v310 = vunpack.c.l.b16 %v279
    %v311 = vunpack.c.l.b16 %v280
    %v312 = vunpack.c.l.b16 %v281
    %v313 = vpack.c.b16 %v302, %v301
    %v314 = vpack.c.b16 %v304, %v303
    %v315 = vpack.c.b16 %v306, %v305
    %v316 = vpack.c.b16 %v308, %v307
    %v317 = vpack.c.b16 %v310, %v309
    %v318 = vpack.c.b16 %v312, %v311
    %v326 = vsel %vm163, %v269, 0
    %328 = vmatprep.subr.bf16.mxu0 0
    %329 = vmatpush1.bf16.msra.mxu0 0
    %330 = vmatprep.subr.bf16.mxu0 0
    %331 = vmatpush1.bf16.msra.mxu0 0
    %332 = vmatprep.subr.bf16.mxu0 0
    %333 = vmatpush1.bf16.msra.mxu0 %v318
    %334 = vmatprep.subr.bf16.mxu0 0
    %335 = vmatpush1.bf16.msra.mxu0 %v317
    %336 = vmatprep.subr.bf16.mxu0 0
    %337 = vmatpush1.bf16.msra.mxu0 %v316
    %338 = vmatprep.subr.bf16.mxu0 0
    %339 = vmatpush1.bf16.msra.mxu0 %v315
    %340 = vmatprep.subr.bf16.mxu0 0
    %341 = vmatpush1.bf16.msra.mxu0 %v314
    %342 = vmatprep.subr.bf16.mxu0 0
    %343 = vmatpush1.bf16.msra.mxu0 %v313
    %344 = vmatprep.subr.bf16.mxu0 0
    %345 = vmatpush2.bf16.msra.mxu0 0
    %346 = vmatprep.subr.bf16.mxu0 0
    %347 = vmatpush2.bf16.msra.mxu0 0
    %348 = vmatprep.subr.bf16.mxu0 0
    %349 = vmatpush2.bf16.msra.mxu0 0
    %350 = vmatprep.subr.bf16.mxu0 0
    %351 = vmatpush2.bf16.msra.mxu0 0
    %352 = vmatprep.subr.bf16.mxu0 0
    %353 = vmatpush2.bf16.msra.mxu0 0
    %354 = vmatprep.subr.bf16.mxu0 0
    %355 = vmatpush2.bf16.msra.mxu0 0
    %356 = vmatprep.subr.bf16.mxu0 0
    %357 = vmatpush2.bf16.msra.mxu0 0
    %358 = vmatprep.subr.bf16.mxu0 0
    %359 = vmatpush2.bf16.msra.mxu0 0
    %360 = vmatprep.mubr.bf16.mxu0 0
    %361 = vmatmul.mubr.bf16.gmra.mxu0 %v326
    %v362 = vpop.f32.mrf.mxu0
    %v363 = vadd.f32 %v287, %v362
    %v364 = vpop.f32.mrf.mxu0
    %v365 = vpop.f32.mrf.mxu0
    %v366 = vadd.f32 %v287, %v365
    %v367 = vpop.f32.mrf.mxu0
    %368 = vdwg.mxu0
    %v371 = vunpack.c.l.s4 1966171168
    %v372 = vunpack.c.0.s8 %v371
    %v373 = vlaneseq
    %v374 = vshrl.u32 %v373, 7
    %v375 = vsub.s32 %v372, %v374
    %v376 = vrot.slane %v202, %v375
    %v377 = vcombine.high %v376, %v376
    %v379 = vunpack.c.l.s4 1966171168
    %v380 = vunpack.c.0.s8 %v379
    %v381 = vlaneseq
    %v382 = vshrl.u32 %v381, 7
    %v383 = vsub.s32 %v380, %v382
    %v384 = vrot.slane %v376, %v383
    %v386 = vunpack.c.l.s4 1966171168
    %v387 = vunpack.c.0.s8 %v386
    %v388 = vlaneseq
    %v389 = vshrl.u32 %v388, 7
    %v390 = vsub.s32 %v387, %v389
    %v391 = vrot.slane %v377, %v390
    %v392 = vlaneseq
    %v393 = vshrl.u32 %v392, 7
    %v394 = vsub.s32 0, %v393
    %v395 = vrot.slane %v384, %v394
    %v396 = vlaneseq
    %v397 = vshrl.u32 %v396, 7
    %v398 = vsub.s32 0, %v397
    %v399 = vrot.slane %v391, %v398
    %v402 = vmul.f32 %v363, %v395
    %v403 = vmul.f32 %v366, %v399
    %v404 = vsel %vm62, %v402, 0.0
    %405 = vadd.xlane.f32.xlu0 %v404
    %v406 = vpop.xlane.xlu0 %405
    %v407 = vsel %vm62, %v403, 0.0
    %408 = vadd.xlane.f32.xlu0 %v407
    %v409 = vpop.xlane.xlu0 %408
    %v410 = vmul.f32 %v406, 0.25
    %v411 = vmul.f32 %v409, 0.25
    %v414 = vlaneseq
    %v415 = vand.u32 %v414, 127
    %v416 = vlaneseq
    %v417 = vshrl.u32 %v416, 7
    %v418 = vsub.s32 %v415, %v417
    %v419 = vrot.slane %v410, %v418
    %v420 = vlaneseq
    %v421 = vshrl.u32 %v420, 7
    %v422 = vsub.s32 %v415, %v421
    %v423 = vrot.slane %v411, %v422
    %vm424 = vcmask 1041409
    %v425 = vsel %vm424, %v423, %v419
    %vm427 = vcmask 58368
    %v428 = vsel %vm427, %v425, -inf
    %429 = vmax.xlane.f32.xlu0 %v428
    %v430 = vpop.xlane.xlu0 %429
    %v432 = vlaneseq
    %v433 = vshrl.u32 %v432, 7
    %v434 = vsub.s32 0, %v433
    %v435 = vrot.slane %v430, %v434
    %v436 = vlaneseq
    %v437 = vshrl.u32 %v436, 7
    %v438 = vsub.s32 1, %v437
    %v439 = vrot.slane %v430, %v438
    %v442 = vsub.f32 %v410, %v435
    %v443 = vsub.f32 %v411, %v439
    %v444 = vmul.f32 %v442, 1.442695
    %v445 = vpow.pop %v444
    %v446 = vmul.f32 %v443, 1.442695
    %v447 = vpow.pop %v446
    %450 = vset.pattern.permute.xlu0 0
    %451 = vperm.xlu0 %450, %v445
    %v452 = vpop.permute.xlu0 %451
    %453 = vset.pattern.permute.xlu0 0
    %454 = vperm.xlu0 %453, %v447
    %v455 = vpop.permute.xlu0 %454
    %v456 = vlaneseq
    %v457 = vshrl.u32 %v456, 7
    %v458 = vsub.s32 %v415, %v457
    %v459 = vrot.slane %v452, %v458
    %v460 = vlaneseq
    %v461 = vshrl.u32 %v460, 7
    %v462 = vsub.s32 %v415, %v461
    %v463 = vrot.slane %v455, %v462
    %v464 = vsel %vm424, %v463, %v459
    %v466 = vsel %vm427, %v464, 0.0
    %467 = vadd.xlane.f32.xlu0 %v466
    %v468 = vpop.xlane.xlu0 %467
    %v469 = vrcp.pop %v468
    %v471 = vlaneseq
    %v472 = vshrl.u32 %v471, 7
    %v473 = vsub.s32 0, %v472
    %v474 = vrot.slane %v469, %v473
    %v475 = vlaneseq
    %v476 = vshrl.u32 %v475, 7
    %v477 = vsub.s32 1, %v476
    %v478 = vrot.slane %v469, %v477
    %v481 = vmul.f32 %v445, %v474
    %v482 = vmul.f32 %v447, %v478
    %484 = vset.pattern.permute.xlu0 0
    %485 = vperm.xlu0 %484, %v481
    %v486 = vpop.permute.xlu0 %485
    %489 = vset.pattern.permute.xlu0 0
    %490 = vperm.xlu0 %489, %v482
    %v491 = vpop.permute.xlu0 %490
    %v493 = vmul.f32 %v486, %v363
    %v494 = vmul.f32 %v491, %v366
    %v495 = vsel %vm62, %v493, 0.0
    %v496 = vrot.slane %v495, 4
    %v497 = vadd.f32 %v495, %v496
    %v498 = vrot.slane %v497, 2
    %v499 = vadd.f32 %v497, %v498
    %v500 = vrot.slane %v499, 1
    %v501 = vadd.f32 %v499, %v500
    %v502 = vsel %vm62, %v494, 0.0
    %v503 = vrot.slane %v502, 4
    %v504 = vadd.f32 %v502, %v503
    %v505 = vrot.slane %v504, 2
    %v506 = vadd.f32 %v504, %v505
    %v507 = vrot.slane %v506, 1
    %v508 = vadd.f32 %v506, %v507
    %511 = vrot.lane.b32.xlu0 %v402, 112
    %v512 = vpop.permute.xlu0 %511
    %513 = vrot.lane.b32.xlu0 %v403, 112
    %v514 = vpop.permute.xlu0 %513
    %v517 = vsel %vm62, %v512, 0.0
    %518 = vadd.xlane.f32.xlu0 %v517
    %v519 = vpop.xlane.xlu0 %518
    %v520 = vsel %vm62, %v514, 0.0
    %521 = vadd.xlane.f32.xlu0 %v520
    %v522 = vpop.xlane.xlu0 %521
    %v523 = vmul.f32 %v519, 0.25
    %v524 = vmul.f32 %v522, 0.25
    %v527 = vlaneseq
    %v528 = vshrl.u32 %v527, 7
    %v529 = vsub.s32 %v415, %v528
    %v530 = vrot.slane %v523, %v529
    %v531 = vlaneseq
    %v532 = vshrl.u32 %v531, 7
    %v533 = vsub.s32 %v415, %v532
    %v534 = vrot.slane %v524, %v533
    %v535 = vsel %vm424, %v534, %v530
    %v537 = vsel %vm427, %v535, -inf
    %538 = vmax.xlane.f32.xlu0 %v537
    %v539 = vpop.xlane.xlu0 %538
    %v541 = vlaneseq
    %v542 = vshrl.u32 %v541, 7
    %v543 = vsub.s32 0, %v542
    %v544 = vrot.slane %v539, %v543
    %v545 = vlaneseq
    %v546 = vshrl.u32 %v545, 7
    %v547 = vsub.s32 1, %v546
    %v548 = vrot.slane %v539, %v547
    %v551 = vsub.f32 %v523, %v544
    %v552 = vsub.f32 %v524, %v548
    %v553 = vmul.f32 %v551, 1.442695
    %v554 = vpow.pop %v553
    %v555 = vmul.f32 %v552, 1.442695
    %v556 = vpow.pop %v555
    %559 = vset.pattern.permute.xlu0 0
    %560 = vperm.xlu0 %559, %v554
    %v561 = vpop.permute.xlu0 %560
    %562 = vset.pattern.permute.xlu0 0
    %563 = vperm.xlu0 %562, %v556
    %v564 = vpop.permute.xlu0 %563
    %v565 = vlaneseq
    %v566 = vshrl.u32 %v565, 7
    %v567 = vsub.s32 %v415, %v566
    %v568 = vrot.slane %v561, %v567
    %v569 = vlaneseq
    %v570 = vshrl.u32 %v569, 7
    %v571 = vsub.s32 %v415, %v570
    %v572 = vrot.slane %v564, %v571
    %v573 = vsel %vm424, %v572, %v568
    %v575 = vsel %vm427, %v573, 0.0
    %576 = vadd.xlane.f32.xlu0 %v575
    %v577 = vpop.xlane.xlu0 %576
    %v578 = vrcp.pop %v577
    %v580 = vlaneseq
    %v581 = vshrl.u32 %v580, 7
    %v582 = vsub.s32 0, %v581
    %v583 = vrot.slane %v578, %v582
    %v584 = vlaneseq
    %v585 = vshrl.u32 %v584, 7
    %v586 = vsub.s32 1, %v585
    %v587 = vrot.slane %v578, %v586
    %v590 = vmul.f32 %v554, %v583
    %v591 = vmul.f32 %v556, %v587
    %593 = vset.pattern.permute.xlu0 0
    %594 = vperm.xlu0 %593, %v590
    %v595 = vpop.permute.xlu0 %594
    %598 = vset.pattern.permute.xlu0 0
    %599 = vperm.xlu0 %598, %v591
    %v600 = vpop.permute.xlu0 %599
    %v602 = vmul.f32 %v595, %v363
    %v603 = vmul.f32 %v600, %v366
    %vm604 = vcmask 261248
    %v605 = vsel %vm604, %v602, 0.0
    %v606 = vrot.slane %v605, 4
    %v607 = vadd.f32 %v605, %v606
    %v608 = vrot.slane %v607, 2
    %v609 = vadd.f32 %v607, %v608
    %v610 = vrot.slane %v609, 1
    %v611 = vadd.f32 %v609, %v610
    %v612 = vsel %vm604, %v603, 0.0
    %v613 = vrot.slane %v612, 4
    %v614 = vadd.f32 %v612, %v613
    %v615 = vrot.slane %v614, 2
    %v616 = vadd.f32 %v614, %v615
    %v617 = vrot.slane %v616, 1
    %v618 = vadd.f32 %v616, %v617
    %619 = vrot.lane.b32.xlu0 %v402, 96
    %v620 = vpop.permute.xlu0 %619
    %621 = vrot.lane.b32.xlu0 %v403, 96
    %v622 = vpop.permute.xlu0 %621
    %v625 = vsel %vm62, %v620, 0.0
    %626 = vadd.xlane.f32.xlu0 %v625
    %v627 = vpop.xlane.xlu0 %626
    %v628 = vsel %vm62, %v622, 0.0
    %629 = vadd.xlane.f32.xlu0 %v628
    %v630 = vpop.xlane.xlu0 %629
    %v631 = vmul.f32 %v627, 0.25
    %v632 = vmul.f32 %v630, 0.25
    %v635 = vlaneseq
    %v636 = vshrl.u32 %v635, 7
    %v637 = vsub.s32 %v415, %v636
    %v638 = vrot.slane %v631, %v637
    %v639 = vlaneseq
    %v640 = vshrl.u32 %v639, 7
    %v641 = vsub.s32 %v415, %v640
    %v642 = vrot.slane %v632, %v641
    %v643 = vsel %vm424, %v642, %v638
    %v645 = vsel %vm427, %v643, -inf
    %646 = vmax.xlane.f32.xlu0 %v645
    %v647 = vpop.xlane.xlu0 %646
    %v649 = vlaneseq
    %v650 = vshrl.u32 %v649, 7
    %v651 = vsub.s32 0, %v650
    %v652 = vrot.slane %v647, %v651
    %v653 = vlaneseq
    %v654 = vshrl.u32 %v653, 7
    %v655 = vsub.s32 1, %v654
    %v656 = vrot.slane %v647, %v655
    %v659 = vsub.f32 %v631, %v652
    %v660 = vsub.f32 %v632, %v656
    %v661 = vmul.f32 %v659, 1.442695
    %v662 = vpow.pop %v661
    %v663 = vmul.f32 %v660, 1.442695
    %v664 = vpow.pop %v663
    %667 = vset.pattern.permute.xlu0 0
    %668 = vperm.xlu0 %667, %v662
    %v669 = vpop.permute.xlu0 %668
    %670 = vset.pattern.permute.xlu0 0
    %671 = vperm.xlu0 %670, %v664
    %v672 = vpop.permute.xlu0 %671
    %v673 = vlaneseq
    %v674 = vshrl.u32 %v673, 7
    %v675 = vsub.s32 %v415, %v674
    %v676 = vrot.slane %v669, %v675
    %v677 = vlaneseq
    %v678 = vshrl.u32 %v677, 7
    %v679 = vsub.s32 %v415, %v678
    %v680 = vrot.slane %v672, %v679
    %v681 = vsel %vm424, %v680, %v676
    %v683 = vsel %vm427, %v681, 0.0
    %684 = vadd.xlane.f32.xlu0 %v683
    %v685 = vpop.xlane.xlu0 %684
    %v686 = vrcp.pop %v685
    %v688 = vlaneseq
    %v689 = vshrl.u32 %v688, 7
    %v690 = vsub.s32 0, %v689
    %v691 = vrot.slane %v686, %v690
    %v692 = vlaneseq
    %v693 = vshrl.u32 %v692, 7
    %v694 = vsub.s32 1, %v693
    %v695 = vrot.slane %v686, %v694
    %v698 = vmul.f32 %v662, %v691
    %v699 = vmul.f32 %v664, %v695
    %701 = vset.pattern.permute.xlu0 0
    %702 = vperm.xlu0 %701, %v698
    %v703 = vpop.permute.xlu0 %702
    %706 = vset.pattern.permute.xlu0 0
    %707 = vperm.xlu0 %706, %v699
    %v708 = vpop.permute.xlu0 %707
    %v710 = vmul.f32 %v703, %v363
    %v711 = vmul.f32 %v708, %v366
    %vm712 = vcmask 392448
    %v713 = vsel %vm712, %v710, 0.0
    %v714 = vrot.slane %v713, 4
    %v715 = vadd.f32 %v713, %v714
    %v716 = vrot.slane %v715, 2
    %v717 = vadd.f32 %v715, %v716
    %v718 = vrot.slane %v717, 1
    %v719 = vadd.f32 %v717, %v718
    %v720 = vsel %vm712, %v711, 0.0
    %v721 = vrot.slane %v720, 4
    %v722 = vadd.f32 %v720, %v721
    %v723 = vrot.slane %v722, 2
    %v724 = vadd.f32 %v722, %v723
    %v725 = vrot.slane %v724, 1
    %v726 = vadd.f32 %v724, %v725
    %v729 = vsel %vm424, %v508, %v501
    %v733 = vsel %vm424, %v618, %v611
    %v737 = vsel %vm424, %v726, %v719
    %v739 = vsel %vm62, %v729, %v733
    %vm740 = vcmask 261120
    %v741 = vsel %vm740, %v739, %v737
    %v742 = vpack.c.bf16 %v741, %v741
    %v743 = vld [vmem:[%s10] sm:$0xf]
    %v744 = vld [vmem:[%s10 + $0x4] sm:$0xf]
    %v745 = vld [vmem:[%s10 + $0x8] sm:$0xf]
    %v746 = vld [vmem:[%s10 + $0xc] sm:$0xf]
    %v747 = vld [vmem:[%s10 + $0x10] sm:$0xf]
    %v748 = vld [vmem:[%s10 + $0x14] sm:$0xf]
    %v749 = vld [vmem:[%s11] sm:$0x1]
    %v751 = vlaneseq
    %v752 = vshrl.u32 %v751, 7
    %v753 = vsub.s32 0, %v752
    %v754 = vrot.slane %v749, %v753
    %v762 = vunpack.c.l.b16 %v743
    %v763 = vunpack.c.l.b16 %v744
    %v764 = vunpack.c.l.b16 %v745
    %v765 = vunpack.c.l.b16 %v746
    %v766 = vunpack.c.l.b16 %v747
    %v767 = vunpack.c.l.b16 %v748
    %v768 = vpack.c.b16 %v763, %v762
    %v769 = vpack.c.b16 %v765, %v764
    %v770 = vpack.c.b16 %v767, %v766
    %vm774 = vcmask 392192
    %v776 = vsel %vm774, %v742, 0
    %778 = vmatprep.subr.bf16.mxu0 0
    %779 = vmatpush1.bf16.msra.mxu0 0
    %780 = vmatprep.subr.bf16.mxu0 0
    %781 = vmatpush1.bf16.msra.mxu0 0
    %782 = vmatprep.subr.bf16.mxu0 0
    %783 = vmatpush1.bf16.msra.mxu0 0
    %784 = vmatprep.subr.bf16.mxu0 0
    %785 = vmatpush1.bf16.msra.mxu0 0
    %786 = vmatprep.subr.bf16.mxu0 0
    %787 = vmatpush1.bf16.msra.mxu0 0
    %788 = vmatprep.subr.bf16.mxu0 0
    %789 = vmatpush1.bf16.msra.mxu0 %v770
    %790 = vmatprep.subr.bf16.mxu0 0
    %791 = vmatpush1.bf16.msra.mxu0 %v769
    %792 = vmatprep.subr.bf16.mxu0 0
    %793 = vmatpush1.bf16.msra.mxu0 %v768
    %794 = vmatprep.subr.bf16.mxu0 0
    %795 = vmatpush2.bf16.msra.mxu0 0
    %796 = vmatprep.subr.bf16.mxu0 0
    %797 = vmatpush2.bf16.msra.mxu0 0
    %798 = vmatprep.subr.bf16.mxu0 0
    %799 = vmatpush2.bf16.msra.mxu0 0
    %800 = vmatprep.subr.bf16.mxu0 0
    %801 = vmatpush2.bf16.msra.mxu0 0
    %802 = vmatprep.subr.bf16.mxu0 0
    %803 = vmatpush2.bf16.msra.mxu0 0
    %804 = vmatprep.subr.bf16.mxu0 0
    %805 = vmatpush2.bf16.msra.mxu0 0
    %806 = vmatprep.subr.bf16.mxu0 0
    %807 = vmatpush2.bf16.msra.mxu0 0
    %808 = vmatprep.subr.bf16.mxu0 0
    %809 = vmatpush2.bf16.msra.mxu0 0
    %810 = vmatprep.mubr.bf16.mxu0 0
    %811 = vmatmul.mubr.bf16.gmra.mxu0 %v776
    %v812 = vpop.f32.mrf.mxu0
    %v813 = vadd.f32 %v754, %v812
    %v814 = vpop.f32.mrf.mxu0
    %v815 = vpop.f32.mrf.mxu0
    %v816 = vpop.f32.mrf.mxu0
    %817 = vdwg.mxu0
    %vm818 = vcmask 91136
    %819 = vst.msk [vmem:[#allocation2] sm:$0x3] %vm818, %v813
    // Predicated region
    $region50: #{n_attn_block.1} parent=1 // pred_check
      _
    $region51: #{n_attn_block.1} parent=1 // pred_check_branch
      %821 = sbr.rel (0) target = $region53
    $region52: #{n_attn_block.1} parent=1 // pred_region
      %s823 = ssub.s32 32, 32
      %824 = vsyncadd [#allocation3], %s823
      %s826 = sshll.u32 [#allocation2], 4
      %s827 = int_to_ptr.vmem [resolvable:$true] %s826
      %829 = dma.vmem_to_hbm [thread:$0]  %s827, 32, %s12, [#allocation3]
    $region53: #{n_attn_block.1} parent=1 // pred_fallthru
      _
    // Predicated region
    $region54: #{n_attn_block.1} parent=1 // pred_check
      _
    $region55: #{n_attn_block.1} parent=1 // pred_check_branch
      %831 = sbr.rel (0) target = $region57
    $region56: #{n_attn_block.1} parent=1 // pred_region
      %832 = dma.done [#allocation3], 32
    $region57: #{n_attn_block.1} parent=1 // pred_fallthru
      _
    %833 = vsyncpa [#allocation3], 1

</llo_original>
